<compile_context>
chip_gen: v7x
topology: tpu7x:2x2x1
jax: 0.10.0
libtpu: 0.0.40
codegen_flags: <defaults>
</compile_context>

<pallas_src>
import jax
import jax.numpy as jnp
from jax.experimental import pallas as pl
from jax.experimental.pallas import tpu as pltpu


_KH = _KW = 3
_KPAD = 64     # per-pixel contraction pad: 9*Cin = 36 -> 64 (lane/MXU friendly)
_LANE = 128


# ---------------------------------------------------------------------------
# Pallas kernel: tiled (over packed-M) GEMM (bf16 in, f32 acc) + bias + SiLU
# ---------------------------------------------------------------------------
def _conv_silu_kernel(x_ref, w_ref, b_ref, o_ref):
    # x_ref: (tm, PACK*KPAD) bf16 packed im2col patches (PACK pixels per row)
    # w_ref: (PACK*KPAD, NPAD) bf16 block-diagonal weights (grid-resident)
    # b_ref: (1, NPAD)        f32  bias tiled PACK times across lanes
    # o_ref: (tm, NPAD)       bf16 lane-dense output (no masked vst)
    acc = jnp.dot(x_ref[...], w_ref[...], preferred_element_type=jnp.float32)
    acc = acc + b_ref[...]
    # SiLU: x * sigmoid(x)   (f32, EUP exp)
    o_ref[...] = (acc * jax.nn.sigmoid(acc)).astype(o_ref.dtype)


def _gemm_bias_silu(packed, w_bd, bias_row, *, tm):
    m4_pad, k_pack = packed.shape
    _, n_pad = w_bd.shape
    assert m4_pad % tm == 0

    cost = pl.CostEstimate(
        flops=2 * m4_pad * k_pack * n_pad,
        transcendentals=m4_pad * n_pad,
        bytes_accessed=(packed.size * 2 + w_bd.size * 2 + bias_row.size * 4
                        + m4_pad * n_pad * 2),
    )
    return pl.pallas_call(
        _conv_silu_kernel,
        out_shape=jax.ShapeDtypeStruct((m4_pad, n_pad), jnp.bfloat16),
        grid_spec=pltpu.PrefetchScalarGridSpec(
            num_scalar_prefetch=0,
            grid=(m4_pad // tm,),
            in_specs=[
                pl.BlockSpec((tm, k_pack), lambda i: (i, 0)),
                pl.BlockSpec((k_pack, n_pad), lambda i: (0, 0)),
                pl.BlockSpec((1, n_pad), lambda i: (0, 0)),
            ],
            out_specs=pl.BlockSpec((tm, n_pad), lambda i: (i, 0)),
        ),
        compiler_params=pltpu.CompilerParams(
            # packed-M axis is fully independent -> shard across v7x's two TCs
            dimension_semantics=("parallel",),
            # explicit limit: covers v5e's 16 MiB default; ~12.5 MiB used at tm=8192
            vmem_limit_bytes=32 * 1024 * 1024,
        ),
        cost_estimate=cost,
    )(packed, w_bd, bias_row)


def _choose_tiling(m4):
    """Pick (tm, m4_pad).  Prefer the biggest row tile (<=8192) that gives an
    even number (>=2) of grid steps (v7x megacore balance); otherwise any tile
    with >=2 steps; tiny inputs fall back to a single 128-row block."""
    tiles = (8192, 4096, 2048, 1024, 512, 256, 128)
    for tm in tiles:                       # even step count, >= 2 steps
        if m4 >= 2 * tm and pl.cdiv(m4, tm) % 2 == 0:
            return tm, pl.cdiv(m4, tm) * tm
    for tm in tiles:                       # any >= 2 steps
        if m4 >= 2 * tm:
            return tm, pl.cdiv(m4, tm) * tm
    tm = 128                               # tiny input: one block
    return tm, pl.cdiv(m4, tm) * tm


# ---------------------------------------------------------------------------
# AutoBackend (JAX / Pallas) -- synthetic fused Conv+SiLU backend model
# ---------------------------------------------------------------------------
class AutoBackendPallas:
    def __init__(self, cin=4, cout=32, fp16=False, seed=0):
        # Flags matching the PyTorch '.pt' backend:
        self.pt = True
        self.nn_module = False
        self.nhwc = False          # pt backend => NCHW public interface
        self.fp16 = fp16           # default False; maps to bf16 on TPU
        self.stride = 32
        self.names = {i: f"class{i}" for i in range(cout)}
        self.cin = cin
        self.cout = cout

        # Deterministic synthetic fused weights: Conv2d(cin, cout, 3, 3) + bias
        k = jax.random.PRNGKey(seed)
        kw, kb = jax.random.split(k)
        self.weight = jax.random.normal(kw, (cout, cin, _KH, _KW), jnp.float32) * 0.1
        self.bias = jax.random.normal(kb, (cout,), jnp.float32) * 0.1

        # Flatten weights once: (Cout, Cin, KH, KW) -> (9*Cin, Cout), row order
        # (kh, kw, c) matching the NHWC im2col; zero-pad K to KPAD.
        kdim = _KH * _KW * cin
        w_flat = jnp.transpose(self.weight, (2, 3, 1, 0)).reshape(kdim, cout)
        w_small = jnp.zeros((_KPAD, cout), jnp.float32).at[:kdim, :].set(w_flat)

        # Block-diagonal repack: PACK pixels per GEMM row -> lane-dense output.
        pack = (_LANE // cout) if (cout <= _LANE and _LANE % cout == 0) else 1
        n_real = pack * cout
        n_pad = ((n_real + _LANE - 1) // _LANE) * _LANE
        w_bd = jnp.zeros((pack * _KPAD, n_pad), jnp.float32)
        for p in range(pack):
            w_bd = w_bd.at[p * _KPAD:(p + 1) * _KPAD,
                           p * cout:(p + 1) * cout].set(w_small)
        self.w_bd_bf16 = w_bd.astype(jnp.bfloat16)
        self.bias_row = (jnp.zeros((1, n_pad), jnp.float32)
                         .at[0, :n_real].set(jnp.tile(self.bias, pack)))
        self._pack = pack
        self._n_real = n_real
        self._kdim = kdim

    def _im2col_nhwc(self, x_nhwc):
        # x: (B, H, W, C) -> patches (B*H*W, 9*C), column order (kh, kw, c).
        B, H, W, C = x_nhwc.shape
        xp = jnp.pad(x_nhwc, ((0, 0), (1, 1), (1, 1), (0, 0)))
        taps = [xp[:, kh:kh + H, kw:kw + W, :]
                for kh in range(_KH) for kw in range(_KW)]       # 9 x (B,H,W,C)
        patches = jnp.concatenate(taps, axis=-1)                 # (B,H,W,9C)
        return patches.reshape(B * H * W, _KH * _KW * C)

    def forward(self, im):
        """im: NCHW float tensor -> NCHW fused conv+SiLU output."""
        b, ch, h, w = im.shape
        assert ch == self.cin

        # fp16 flag: TPU MXU is a bf16 engine; half precision maps to bf16.
        compute_dtype = jnp.bfloat16
        out_dtype = jnp.bfloat16 if self.fp16 else jnp.float32

        # NCHW -> NHWC once on the raw input (cheap); conv runs channel-minor.
        x = jnp.transpose(im, (0, 2, 3, 1)).astype(compute_dtype)

        # --- glue: NHWC im2col, pad K (36->64) and M (-> pack*tile multiple) ---
        patches = self._im2col_nhwc(x)                           # (M, 9*Cin) bf16
        M, kdim = patches.shape
        pack = self._pack
        m4 = pl.cdiv(M, pack)
        tm, m4_pad = _choose_tiling(m4)
        m_pad = m4_pad * pack
        patches = jnp.pad(patches, ((0, m_pad - M), (0, _KPAD - kdim)))
        packed = patches.reshape(m4_pad, pack * _KPAD)           # (M/4, 256)

        # --- hot path: Pallas GEMM + bias + SiLU (lane-dense bf16 output) ---
        y = _gemm_bias_silu(packed, self.w_bd_bf16, self.bias_row, tm=tm)

        # undo repack / padding; back to NCHW (PyTorch convention), cast last
        y = y[:, :self._n_real].reshape(m_pad, self.cout)[:M]    # (M, Cout) bf16
        y = y.reshape(b, h, w, self.cout)
        y = jnp.transpose(y, (0, 3, 1, 2))                       # (B, Cout, H, W)
        return y.astype(out_dtype)

    __call__ = forward

    # TODO(synk): warmup()/_model_type()/from_numpy() backend-dispatch logic
    # (ONNX/TFLite/TensorRT etc.) is pure I/O plumbing with no Pallas
    # equivalent; only the 'pt' compute path is implemented.


# ---------------------------------------------------------------------------
# Reference (pure JAX) for correctness check — bf16-in / f32-acc precision
# ---------------------------------------------------------------------------
def _reference_forward(model, im):
    x = im.astype(jnp.bfloat16)
    wgt = model.weight.astype(jnp.bfloat16)
    y = jax.lax.conv_general_dilated(
        x, wgt, window_strides=(1, 1), padding="SAME",
        dimension_numbers=("NCHW", "OIHW", "NCHW"),
        preferred_element_type=jnp.float32)
    y = y + model.bias.reshape(1, -1, 1, 1)
    return y * jax.nn.sigmoid(y)


if __name__ == "__main__":
    key = jax.random.PRNGKey(0)
    x = jax.random.normal(key, (2, 4, 16, 16), jnp.float32)  # NCHW

    backend = AutoBackendPallas(cin=4, cout=32, fp16=False, seed=0)
    out = backend(x)
    out = jax.block_until_ready(out)

    ref = _reference_forward(backend, x)
    assert out.shape == (2, 32, 16, 16), out.shape
    assert out.dtype == jnp.float32, out.dtype
    assert jnp.allclose(out, ref, atol=2e-2, rtol=2e-2), \
        float(jnp.max(jnp.abs(out - ref)))

    print("KERNEL_OK")
</pallas_src>

<mosaic_0001>
module attributes {stable_mosaic.version = 11 : i64} {
  func.func @_conv_silu_kernel(%arg0: i32, %arg1: memref<128x256xbf16, #tpu.memory_space<vmem>>, %arg2: memref<256x128xbf16, #tpu.memory_space<vmem>>, %arg3: memref<1x128xf32, #tpu.memory_space<vmem>>, %arg4: memref<128x128xbf16, #tpu.memory_space<vmem>>) attributes {dimension_semantics = [#tpu.dimension_semantics<parallel>], iteration_bounds = array<i64: 1>, scalar_prefetch = 0 : i64, scratch_operands = 0 : i64, tpu.core_type = #tpu.core_type<tc>, window_params = [{transform_indices = @transform_0, window_bounds = array<i64: 128, 256>}, {pipeline_mode = #tpu.pipeline_mode<synchronous>, transform_indices = @transform_1, window_bounds = array<i64: 256, 128>}, {pipeline_mode = #tpu.pipeline_mode<synchronous>, transform_indices = @transform_2, window_bounds = array<i64: 1, 128>}, {transform_indices = @transform_3, window_bounds = array<i64: 128, 128>}]} {
    %c0 = arith.constant 0 : index
    %c0_0 = arith.constant 0 : index
    %0 = vector.load %arg1[%c0, %c0_0] : memref<128x256xbf16, #tpu.memory_space<vmem>>, vector<128x256xbf16>
    %c0_1 = arith.constant 0 : index
    %c0_2 = arith.constant 0 : index
    %1 = vector.load %arg2[%c0_1, %c0_2] : memref<256x128xbf16, #tpu.memory_space<vmem>>, vector<256x128xbf16>
    %cst = arith.constant dense<0.000000e+00> : vector<128x128xf32>
    %2 = tpu.matmul %0, %1, %cst {dimension_numbers = #tpu.dot_dimension_numbers<[1], [0], [0], [1], [0, 0, 1, 1], [], []>} : vector<128x256xbf16>, vector<256x128xbf16>, vector<128x128xf32> -> vector<128x128xf32>
    %c0_3 = arith.constant 0 : index
    %c0_4 = arith.constant 0 : index
    %3 = vector.load %arg3[%c0_3, %c0_4] : memref<1x128xf32, #tpu.memory_space<vmem>>, vector<1x128xf32>
    %4 = vector.broadcast %3 : vector<1x128xf32> to vector<128x128xf32>
    %5 = arith.addf %2, %4 : vector<128x128xf32>
    %6 = arith.negf %5 : vector<128x128xf32>
    %7 = math.exp %6 : vector<128x128xf32>
    %cst_5 = arith.constant 1.000000e+00 : f32
    %8 = vector.broadcast %cst_5 : f32 to vector<128x128xf32>
    %9 = arith.addf %8, %7 : vector<128x128xf32>
    %10 = arith.divf %8, %9 : vector<128x128xf32>
    %11 = arith.mulf %5, %10 : vector<128x128xf32>
    %12 = arith.truncf %11 : vector<128x128xf32> to vector<128x128xbf16>
    %c0_6 = arith.constant 0 : index
    %c0_7 = arith.constant 0 : index
    %13 = vector.load %arg4[%c0_6, %c0_7] : memref<128x128xbf16, #tpu.memory_space<vmem>>, vector<128x128xbf16>
    tpu.vector_store %arg4[%c0_6, %c0_7], %12 {strides = array<i32>} : memref<128x128xbf16, #tpu.memory_space<vmem>>, vector<128x128xbf16>,
    return
  }
  func.func @transform_0(%arg0: i32) -> (i32, i32) {
    %c0_i32 = arith.constant 0 : i32
    %c0_i32_0 = arith.constant 0 : i32
    return %arg0, %c0_i32 : i32, i32
  }
  func.func @transform_1(%arg0: i32) -> (i32, i32) {
    %c0_i32 = arith.constant 0 : i32
    %c0_i32_0 = arith.constant 0 : i32
    %c0_i32_1 = arith.constant 0 : i32
    return %c0_i32, %c0_i32_0 : i32, i32
  }
  func.func @transform_2(%arg0: i32) -> (i32, i32) {
    %c0_i32 = arith.constant 0 : i32
    %c0_i32_0 = arith.constant 0 : i32
    %c0_i32_1 = arith.constant 0 : i32
    return %c0_i32, %c0_i32_0 : i32, i32
  }
  func.func @transform_3(%arg0: i32) -> (i32, i32) {
    %c0_i32 = arith.constant 0 : i32
    %c0_i32_0 = arith.constant 0 : i32
    return %arg0, %c0_i32 : i32, i32
  }
}

</mosaic_0001>

<llo_original>
// kernel: tpu_custom_call.1
$region0: #{tpu_custom_call.1}
  #allocation0 [shape = 'u32[]', space=smem, size = 0x4, offset = 0x4, fixed_abs, tag = 'smem constant byte address 0x4 - core index']
  #allocation1 [shape = 'u32[144,128]{1,0:T(1,128)}', space=vmem, size = 0x12000, scoped, tag = 'internal scratch']
  %s0 = inlined_call_operand.hbm [shape: bf16[128,256], index: 0, kind: input, shape index: {}]
  %s1 = inlined_call_operand.hbm [shape: bf16[256,128], index: 1, kind: input, shape index: {}]
  %s2 = inlined_call_operand.vmem [shape: f32[1,128], index: 2, kind: input, shape index: {}]
  %s3 = inlined_call_operand.hbm [shape: bf16[128,128], index: 3, kind: output, shape index: {}]
  %s4 = sld [smem:[#allocation0]]
  $region30: #{tpu_custom_call.1} parent=0
    _
  %s6 = ssub.s32 1, %s4
  %s7 = scalar_select 0, %s6, %s4
  $region1: #{tpu_custom_call.1} parent=0
    #allocation2 [shape = 'u8[65536]{0}', space=vmem, size = 0x10000, scoped, tag = 'input window, operand 0, single buffered']
    #allocation3 [shape = 's32[1]{0}', space=sflag, size = 0x4, scoped, tag = 'scoped memory for tpu_custom_call.1']
    #allocation4 [shape = 's32[1]{0}', space=sflag, size = 0x4, scoped, tag = 'scoped memory for tpu_custom_call.1']
    #allocation5 [shape = 'u8[65536]{0}', space=vmem, size = 0x10000, scoped, tag = 'input window, operand 1, single buffered']
    #allocation6 [shape = 's32[1]{0}', space=sflag, size = 0x4, scoped, tag = 'scoped memory for tpu_custom_call.1']
    #allocation7 [shape = 'u8[32768]{0}', space=vmem, size = 0x8000, scoped, tag = 'output window, operand 0, single buffered']
    %8 = vsyncpa [#allocation3], 0
    %9 = vsyncpa [#allocation6], 0
    %10 = vsyncpa [#allocation4], 0
    // Predicated region
    $region2: #{tpu_custom_call.1} parent=1 // pred_check
      _
    $region3: #{tpu_custom_call.1} parent=1 // pred_check_branch
      %12 = sbr.rel (0) target = $region5
    $region4: #{tpu_custom_call.1} parent=1 // pred_region
      %s14 = ssub.s32 2048, 2048
      %15 = vsyncadd [#allocation3], %s14
      %s16 = sshll.u32 [#allocation2], 4
      %s17 = int_to_ptr.vmem [resolvable:$true] %s16
      %22 = dma.hbm_to_vmem [thread:$0]  %s0, 2048, %s17, [#allocation3], 128, 128, 8
    $region5: #{tpu_custom_call.1} parent=1 // pred_fallthru
      _
    // Predicated region
    $region6: #{tpu_custom_call.1} parent=1 // pred_check
      _
    $region7: #{tpu_custom_call.1} parent=1 // pred_check_branch
      %24 = sbr.rel (0) target = $region9
    $region8: #{tpu_custom_call.1} parent=1 // pred_region
      %s26 = ssub.s32 2048, 2048
      %27 = vsyncadd [#allocation6], %s26
      %s28 = sshll.u32 [#allocation5], 4
      %s29 = int_to_ptr.vmem [resolvable:$true] %s28
      %34 = dma.hbm_to_vmem [thread:$0]  %s1, 2048, %s29, [#allocation6], 64, 64, 4
    $region9: #{tpu_custom_call.1} parent=1 // pred_fallthru
      _
    // Predicated region
    $region10: #{tpu_custom_call.1} parent=1 // pred_check
      _
    $region11: #{tpu_custom_call.1} parent=1 // pred_check_branch
      %36 = sbr.rel (0) target = $region13
    $region12: #{tpu_custom_call.1} parent=1 // pred_region
      _
    $region13: #{tpu_custom_call.1} parent=1 // pred_fallthru
      _
    // Predicated region
    $region14: #{tpu_custom_call.1} parent=1 // pred_check
      _
    $region15: #{tpu_custom_call.1} parent=1 // pred_check_branch
      %38 = sbr.rel (0) target = $region17
    $region16: #{tpu_custom_call.1} parent=1 // pred_region
      %39 = dma.done [#allocation3], 2048
    $region17: #{tpu_custom_call.1} parent=1 // pred_fallthru
      _
    // Predicated region
    $region18: #{tpu_custom_call.1} parent=1 // pred_check
      _
    $region19: #{tpu_custom_call.1} parent=1 // pred_check_branch
      %41 = sbr.rel (0) target = $region21
    $region20: #{tpu_custom_call.1} parent=1 // pred_region
      %42 = dma.done [#allocation6], 2048
    $region21: #{tpu_custom_call.1} parent=1 // pred_fallthru
      _
    %v44 = vld [vmem:[#allocation2] sm:$0xff]
    %v45 = vld [vmem:[#allocation2 + $0x8] sm:$0xff]
    %v46 = vld [vmem:[#allocation2 + $0x10] sm:$0xff]
    %v47 = vld [vmem:[#allocation2 + $0x18] sm:$0xff]
    %v48 = vld [vmem:[#allocation2 + $0x20] sm:$0xff]
    %v49 = vld [vmem:[#allocation2 + $0x28] sm:$0xff]
    %v50 = vld [vmem:[#allocation2 + $0x30] sm:$0xff]
    %v51 = vld [vmem:[#allocation2 + $0x38] sm:$0xff]
    %v52 = vld [vmem:[#allocation2 + $0x40] sm:$0xff]
    %v53 = vld [vmem:[#allocation2 + $0x48] sm:$0xff]
    %v54 = vld [vmem:[#allocation2 + $0x50] sm:$0xff]
    %v55 = vld [vmem:[#allocation2 + $0x58] sm:$0xff]
    %v56 = vld [vmem:[#allocation2 + $0x60] sm:$0xff]
    %v57 = vld [vmem:[#allocation2 + $0x68] sm:$0xff]
    %v58 = vld [vmem:[#allocation2 + $0x70] sm:$0xff]
    %v59 = vld [vmem:[#allocation2 + $0x78] sm:$0xff]
    %v60 = vld [vmem:[#allocation5] sm:$0xf]
    %v61 = vld [vmem:[#allocation5 + $0x4] sm:$0xf]
    %v62 = vld [vmem:[#allocation5 + $0x8] sm:$0xf]
    %v63 = vld [vmem:[#allocation5 + $0xc] sm:$0xf]
    %v64 = vld [vmem:[#allocation5 + $0x10] sm:$0xf]
    %v65 = vld [vmem:[#allocation5 + $0x14] sm:$0xf]
    %v66 = vld [vmem:[#allocation5 + $0x18] sm:$0xf]
    %v67 = vld [vmem:[#allocation5 + $0x1c] sm:$0xf]
    %v68 = vld [vmem:[#allocation5 + $0x20] sm:$0xf]
    %v69 = vld [vmem:[#allocation5 + $0x24] sm:$0xf]
    %v70 = vld [vmem:[#allocation5 + $0x28] sm:$0xf]
    %v71 = vld [vmem:[#allocation5 + $0x2c] sm:$0xf]
    %v72 = vld [vmem:[#allocation5 + $0x30] sm:$0xf]
    %v73 = vld [vmem:[#allocation5 + $0x34] sm:$0xf]
    %v74 = vld [vmem:[#allocation5 + $0x38] sm:$0xf]
    %v75 = vld [vmem:[#allocation5 + $0x3c] sm:$0xf]
    %v76 = vld [vmem:[#allocation5 + $0x40] sm:$0xf]
    %v77 = vld [vmem:[#allocation5 + $0x44] sm:$0xf]
    %v78 = vld [vmem:[#allocation5 + $0x48] sm:$0xf]
    %v79 = vld [vmem:[#allocation5 + $0x4c] sm:$0xf]
    %v80 = vld [vmem:[#allocation5 + $0x50] sm:$0xf]
    %v81 = vld [vmem:[#allocation5 + $0x54] sm:$0xf]
    %v82 = vld [vmem:[#allocation5 + $0x58] sm:$0xf]
    %v83 = vld [vmem:[#allocation5 + $0x5c] sm:$0xf]
    %v84 = vld [vmem:[#allocation5 + $0x60] sm:$0xf]
    %v85 = vld [vmem:[#allocation5 + $0x64] sm:$0xf]
    %v86 = vld [vmem:[#allocation5 + $0x68] sm:$0xf]
    %v87 = vld [vmem:[#allocation5 + $0x6c] sm:$0xf]
    %v88 = vld [vmem:[#allocation5 + $0x70] sm:$0xf]
    %v89 = vld [vmem:[#allocation5 + $0x74] sm:$0xf]
    %v90 = vld [vmem:[#allocation5 + $0x78] sm:$0xf]
    %v91 = vld [vmem:[#allocation5 + $0x7c] sm:$0xf]
    %v92 = vld [vmem:[%s2] sm:$0x1]
    %v94 = vlaneseq
    %v95 = vshrl.u32 %v94, 7
    %v96 = vsub.s32 0, %v95
    %v97 = vrot.slane %v92, %v96
    %v115 = vunpack.c.l.b16 %v44
    %v116 = vunpack.c.h.b16 %v44
    %v117 = vunpack.c.l.b16 %v45
    %v118 = vunpack.c.h.b16 %v45
    %v119 = vunpack.c.l.b16 %v46
    %v120 = vunpack.c.h.b16 %v46
    %v121 = vunpack.c.l.b16 %v47
    %v122 = vunpack.c.h.b16 %v47
    %v123 = vunpack.c.l.b16 %v48
    %v124 = vunpack.c.h.b16 %v48
    %v125 = vunpack.c.l.b16 %v49
    %v126 = vunpack.c.h.b16 %v49
    %v127 = vunpack.c.l.b16 %v50
    %v128 = vunpack.c.h.b16 %v50
    %v129 = vunpack.c.l.b16 %v51
    %v130 = vunpack.c.h.b16 %v51
    %v131 = vunpack.c.l.b16 %v52
    %v132 = vunpack.c.h.b16 %v52
    %v133 = vunpack.c.l.b16 %v53
    %v134 = vunpack.c.h.b16 %v53
    %v135 = vunpack.c.l.b16 %v54
    %v136 = vunpack.c.h.b16 %v54
    %v137 = vunpack.c.l.b16 %v55
    %v138 = vunpack.c.h.b16 %v55
    %v139 = vunpack.c.l.b16 %v56
    %v140 = vunpack.c.h.b16 %v56
    %v141 = vunpack.c.l.b16 %v57
    %v142 = vunpack.c.h.b16 %v57
    %v143 = vunpack.c.l.b16 %v58
    %v144 = vunpack.c.h.b16 %v58
    %v145 = vunpack.c.l.b16 %v59
    %v146 = vunpack.c.h.b16 %v59
    %v147 = vpack.c.b16 %v117, %v115
    %v148 = vpack.c.b16 %v118, %v116
    %v149 = vpack.c.b16 %v121, %v119
    %v150 = vpack.c.b16 %v122, %v120
    %v151 = vpack.c.b16 %v125, %v123
    %v152 = vpack.c.b16 %v126, %v124
    %v153 = vpack.c.b16 %v129, %v127
    %v154 = vpack.c.b16 %v130, %v128
    %v155 = vpack.c.b16 %v133, %v131
    %v156 = vpack.c.b16 %v134, %v132
    %v157 = vpack.c.b16 %v137, %v135
    %v158 = vpack.c.b16 %v138, %v136
    %v159 = vpack.c.b16 %v141, %v139
    %v160 = vpack.c.b16 %v142, %v140
    %v161 = vpack.c.b16 %v145, %v143
    %v162 = vpack.c.b16 %v146, %v144
    %v211 = vunpack.c.l.b16 %v60
    %v212 = vunpack.c.l.b16 %v61
    %v213 = vunpack.c.l.b16 %v62
    %v214 = vunpack.c.l.b16 %v63
    %v215 = vunpack.c.l.b16 %v64
    %v216 = vunpack.c.l.b16 %v65
    %v217 = vunpack.c.l.b16 %v66
    %v218 = vunpack.c.l.b16 %v67
    %v219 = vunpack.c.l.b16 %v68
    %v220 = vunpack.c.l.b16 %v69
    %v221 = vunpack.c.l.b16 %v70
    %v222 = vunpack.c.l.b16 %v71
    %v223 = vunpack.c.l.b16 %v72
    %v224 = vunpack.c.l.b16 %v73
    %v225 = vunpack.c.l.b16 %v74
    %v226 = vunpack.c.l.b16 %v75
    %v227 = vunpack.c.l.b16 %v76
    %v228 = vunpack.c.l.b16 %v77
    %v229 = vunpack.c.l.b16 %v78
    %v230 = vunpack.c.l.b16 %v79
    %v231 = vunpack.c.l.b16 %v80
    %v232 = vunpack.c.l.b16 %v81
    %v233 = vunpack.c.l.b16 %v82
    %v234 = vunpack.c.l.b16 %v83
    %v235 = vunpack.c.l.b16 %v84
    %v236 = vunpack.c.l.b16 %v85
    %v237 = vunpack.c.l.b16 %v86
    %v238 = vunpack.c.l.b16 %v87
    %v239 = vunpack.c.l.b16 %v88
    %v240 = vunpack.c.l.b16 %v89
    %v241 = vunpack.c.l.b16 %v90
    %v242 = vunpack.c.l.b16 %v91
    %v243 = vpack.c.b16 %v212, %v211
    %v244 = vpack.c.b16 %v214, %v213
    %v245 = vpack.c.b16 %v216, %v215
    %v246 = vpack.c.b16 %v218, %v217
    %v247 = vpack.c.b16 %v220, %v219
    %v248 = vpack.c.b16 %v222, %v221
    %v249 = vpack.c.b16 %v224, %v223
    %v250 = vpack.c.b16 %v226, %v225
    %v251 = vpack.c.b16 %v228, %v227
    %v252 = vpack.c.b16 %v230, %v229
    %v253 = vpack.c.b16 %v232, %v231
    %v254 = vpack.c.b16 %v234, %v233
    %v255 = vpack.c.b16 %v236, %v235
    %v256 = vpack.c.b16 %v238, %v237
    %v257 = vpack.c.b16 %v240, %v239
    %v258 = vpack.c.b16 %v242, %v241
    %275 = vmatprep.subr.bf16.mxu0 0
    %276 = vmatpush1.bf16.msra.mxu0 %v243
    %277 = vmatprep.subr.bf16.mxu0 0
    %278 = vmatpush1.bf16.msra.mxu0 %v244
    %279 = vmatprep.subr.bf16.mxu0 0
    %280 = vmatpush1.bf16.msra.mxu0 %v245
    %281 = vmatprep.subr.bf16.mxu0 0
    %282 = vmatpush1.bf16.msra.mxu0 %v246
    %283 = vmatprep.subr.bf16.mxu0 0
    %284 = vmatpush1.bf16.msra.mxu0 %v247
    %285 = vmatprep.subr.bf16.mxu0 0
    %286 = vmatpush1.bf16.msra.mxu0 %v248
    %287 = vmatprep.subr.bf16.mxu0 0
    %288 = vmatpush1.bf16.msra.mxu0 %v249
    %289 = vmatprep.subr.bf16.mxu0 0
    %290 = vmatpush1.bf16.msra.mxu0 %v250
    %291 = vmatprep.subr.bf16.mxu0 0
    %292 = vmatpush1.bf16.msra.mxu0 %v251
    %293 = vmatprep.subr.bf16.mxu0 0
    %294 = vmatpush1.bf16.msra.mxu0 %v252
    %295 = vmatprep.subr.bf16.mxu0 0
    %296 = vmatpush1.bf16.msra.mxu0 %v253
    %297 = vmatprep.subr.bf16.mxu0 0
    %298 = vmatpush1.bf16.msra.mxu0 %v254
    %299 = vmatprep.subr.bf16.mxu0 0
    %300 = vmatpush1.bf16.msra.mxu0 %v255
    %301 = vmatprep.subr.bf16.mxu0 0
    %302 = vmatpush1.bf16.msra.mxu0 %v256
    %303 = vmatprep.subr.bf16.mxu0 0
    %304 = vmatpush1.bf16.msra.mxu0 %v257
    %305 = vmatprep.subr.bf16.mxu0 0
    %306 = vmatpush1.bf16.msra.mxu0 %v258
    %307 = vmatprep.mubr.bf16.mxu0 %v148
    %308 = vmatmul.mubr.bf16.gmra.mrb[0].mxu0 %v147
    %v309 = vpop.f32.mrb[0].mxu0
    %v310 = vadd.f32 %v97, %v309
    %v311 = vpop.f32.mrb[0].mxu0
    %v312 = vpop.f32.mrb[0].mxu0
    %v313 = vadd.f32 %v97, %v312
    %v314 = vpop.f32.mrb[0].mxu0
    %315 = vmatprep.mubr.bf16.mxu0 %v150
    %316 = vmatmul.mubr.bf16.gmra.mrb[0].mxu0 %v149
    %v317 = vpop.f32.mrb[0].mxu0
    %v318 = vadd.f32 %v97, %v317
    %v319 = vpop.f32.mrb[0].mxu0
    %v320 = vpop.f32.mrb[0].mxu0
    %v321 = vadd.f32 %v97, %v320
    %v322 = vpop.f32.mrb[0].mxu0
    %323 = vmatprep.mubr.bf16.mxu0 %v152
    %324 = vmatmul.mubr.bf16.gmra.mrb[0].mxu0 %v151
    %v325 = vpop.f32.mrb[0].mxu0
    %v326 = vadd.f32 %v97, %v325
    %v327 = vpop.f32.mrb[0].mxu0
    %v328 = vpop.f32.mrb[0].mxu0
    %v329 = vadd.f32 %v97, %v328
    %v330 = vpop.f32.mrb[0].mxu0
    %331 = vmatprep.mubr.bf16.mxu0 %v154
    %332 = vmatmul.mubr.bf16.gmra.mrb[0].mxu0 %v153
    %v333 = vpop.f32.mrb[0].mxu0
    %v334 = vadd.f32 %v97, %v333
    %v335 = vpop.f32.mrb[0].mxu0
    %v336 = vpop.f32.mrb[0].mxu0
    %v337 = vadd.f32 %v97, %v336
    %v338 = vpop.f32.mrb[0].mxu0
    %339 = vmatprep.mubr.bf16.mxu0 %v156
    %340 = vmatmul.mubr.bf16.gmra.mrb[0].mxu0 %v155
    %v341 = vpop.f32.mrb[0].mxu0
    %v342 = vadd.f32 %v97, %v341
    %v343 = vpop.f32.mrb[0].mxu0
    %v344 = vpop.f32.mrb[0].mxu0
    %v345 = vadd.f32 %v97, %v344
    %v346 = vpop.f32.mrb[0].mxu0
    %347 = vmatprep.mubr.bf16.mxu0 %v158
    %348 = vmatmul.mubr.bf16.gmra.mrb[0].mxu0 %v157
    %v349 = vpop.f32.mrb[0].mxu0
    %v350 = vadd.f32 %v97, %v349
    %v351 = vpop.f32.mrb[0].mxu0
    %v352 = vpop.f32.mrb[0].mxu0
    %v353 = vadd.f32 %v97, %v352
    %v354 = vpop.f32.mrb[0].mxu0
    %355 = vmatprep.mubr.bf16.mxu0 %v160
    %356 = vmatmul.mubr.bf16.gmra.mrb[0].mxu0 %v159
    %v357 = vpop.f32.mrb[0].mxu0
    %v358 = vadd.f32 %v97, %v357
    %v359 = vpop.f32.mrb[0].mxu0
    %v360 = vpop.f32.mrb[0].mxu0
    %v361 = vadd.f32 %v97, %v360
    %v362 = vpop.f32.mrb[0].mxu0
    %363 = vmatprep.mubr.bf16.mxu0 %v162
    %364 = vmatmul.mubr.bf16.gmra.mrb[0].mxu0 %v161
    %v365 = vpop.f32.mrb[0].mxu0
    %v366 = vadd.f32 %v97, %v365
    %v367 = vpop.f32.mrb[0].mxu0
    %v368 = vpop.f32.mrb[0].mxu0
    %v369 = vadd.f32 %v97, %v368
    %v370 = vpop.f32.mrb[0].mxu0
    %371 = vdwg.mxu0
    %v372 = vxor.u32 %v310, 2147483648
    %v373 = vxor.u32 %v313, 2147483648
    %v374 = vxor.u32 %v318, 2147483648
    %v375 = vxor.u32 %v321, 2147483648
    %v376 = vxor.u32 %v326, 2147483648
    %v377 = vxor.u32 %v329, 2147483648
    %v378 = vxor.u32 %v334, 2147483648
    %v379 = vxor.u32 %v337, 2147483648
    %v380 = vxor.u32 %v342, 2147483648
    %v381 = vxor.u32 %v345, 2147483648
    %v382 = vxor.u32 %v350, 2147483648
    %v383 = vxor.u32 %v353, 2147483648
    %v384 = vxor.u32 %v358, 2147483648
    %v385 = vxor.u32 %v361, 2147483648
    %v386 = vxor.u32 %v366, 2147483648
    %v387 = vxor.u32 %v369, 2147483648
    %v388 = vmul.f32 %v372, 1.442695
    %v389 = vpow.pop %v388
    %v390 = vmul.f32 %v373, 1.442695
    %v391 = vpow.pop %v390
    %v392 = vmul.f32 %v374, 1.442695
    %v393 = vpow.pop %v392
    %v394 = vmul.f32 %v375, 1.442695
    %v395 = vpow.pop %v394
    %v396 = vmul.f32 %v376, 1.442695
    %v397 = vpow.pop %v396
    %v398 = vmul.f32 %v377, 1.442695
    %v399 = vpow.pop %v398
    %v400 = vmul.f32 %v378, 1.442695
    %v401 = vpow.pop %v400
    %v402 = vmul.f32 %v379, 1.442695
    %v403 = vpow.pop %v402
    %v404 = vmul.f32 %v380, 1.442695
    %v405 = vpow.pop %v404
    %v406 = vmul.f32 %v381, 1.442695
    %v407 = vpow.pop %v406
    %v408 = vmul.f32 %v382, 1.442695
    %v409 = vpow.pop %v408
    %v410 = vmul.f32 %v383, 1.442695
    %v411 = vpow.pop %v410
    %v412 = vmul.f32 %v384, 1.442695
    %v413 = vpow.pop %v412
    %v414 = vmul.f32 %v385, 1.442695
    %v415 = vpow.pop %v414
    %v416 = vmul.f32 %v386, 1.442695
    %v417 = vpow.pop %v416
    %v418 = vmul.f32 %v387, 1.442695
    %v419 = vpow.pop %v418
    %v420 = vadd.f32 %v389, 1.0
    %v421 = vadd.f32 %v391, 1.0
    %v422 = vadd.f32 %v393, 1.0
    %v423 = vadd.f32 %v395, 1.0
    %v424 = vadd.f32 %v397, 1.0
    %v425 = vadd.f32 %v399, 1.0
    %v426 = vadd.f32 %v401, 1.0
    %v427 = vadd.f32 %v403, 1.0
    %v428 = vadd.f32 %v405, 1.0
    %v429 = vadd.f32 %v407, 1.0
    %v430 = vadd.f32 %v409, 1.0
    %v431 = vadd.f32 %v411, 1.0
    %v432 = vadd.f32 %v413, 1.0
    %v433 = vadd.f32 %v415, 1.0
    %v434 = vadd.f32 %v417, 1.0
    %v435 = vadd.f32 %v419, 1.0
    %v436 = vrcp.pop %v420
    %v437 = vmul.f32 1.0, %v436
    %v438 = vrcp.pop %v421
    %v439 = vmul.f32 1.0, %v438
    %v440 = vrcp.pop %v422
    %v441 = vmul.f32 1.0, %v440
    %v442 = vrcp.pop %v423
    %v443 = vmul.f32 1.0, %v442
    %v444 = vrcp.pop %v424
    %v445 = vmul.f32 1.0, %v444
    %v446 = vrcp.pop %v425
    %v447 = vmul.f32 1.0, %v446
    %v448 = vrcp.pop %v426
    %v449 = vmul.f32 1.0, %v448
    %v450 = vrcp.pop %v427
    %v451 = vmul.f32 1.0, %v450
    %v452 = vrcp.pop %v428
    %v453 = vmul.f32 1.0, %v452
    %v454 = vrcp.pop %v429
    %v455 = vmul.f32 1.0, %v454
    %v456 = vrcp.pop %v430
    %v457 = vmul.f32 1.0, %v456
    %v458 = vrcp.pop %v431
    %v459 = vmul.f32 1.0, %v458
    %v460 = vrcp.pop %v432
    %v461 = vmul.f32 1.0, %v460
    %v462 = vrcp.pop %v433
    %v463 = vmul.f32 1.0, %v462
    %v464 = vrcp.pop %v434
    %v465 = vmul.f32 1.0, %v464
    %v466 = vrcp.pop %v435
    %v467 = vmul.f32 1.0, %v466
    %v468 = vmul.f32 %v310, %v437
    %v469 = vmul.f32 %v313, %v439
    %v470 = vmul.f32 %v318, %v441
    %v471 = vmul.f32 %v321, %v443
    %v472 = vmul.f32 %v326, %v445
    %v473 = vmul.f32 %v329, %v447
    %v474 = vmul.f32 %v334, %v449
    %v475 = vmul.f32 %v337, %v451
    %v476 = vmul.f32 %v342, %v453
    %v477 = vmul.f32 %v345, %v455
    %v478 = vmul.f32 %v350, %v457
    %v479 = vmul.f32 %v353, %v459
    %v480 = vmul.f32 %v358, %v461
    %v481 = vmul.f32 %v361, %v463
    %v482 = vmul.f32 %v366, %v465
    %v483 = vmul.f32 %v369, %v467
    %v484 = vpack.c.bf16 %v469, %v468
    %v485 = vpack.c.bf16 %v471, %v470
    %v486 = vpack.c.bf16 %v473, %v472
    %v487 = vpack.c.bf16 %v475, %v474
    %v488 = vpack.c.bf16 %v477, %v476
    %v489 = vpack.c.bf16 %v479, %v478
    %v490 = vpack.c.bf16 %v481, %v480
    %v491 = vpack.c.bf16 %v483, %v482
    %v500 = vunpack.c.l.b16 %v484
    %v501 = vunpack.c.h.b16 %v484
    %v502 = vunpack.c.l.b16 %v485
    %v503 = vunpack.c.h.b16 %v485
    %v504 = vunpack.c.l.b16 %v486
    %v505 = vunpack.c.h.b16 %v486
    %v506 = vunpack.c.l.b16 %v487
    %v507 = vunpack.c.h.b16 %v487
    %v508 = vunpack.c.l.b16 %v488
    %v509 = vunpack.c.h.b16 %v488
    %v510 = vunpack.c.l.b16 %v489
    %v511 = vunpack.c.h.b16 %v489
    %v512 = vunpack.c.l.b16 %v490
    %v513 = vunpack.c.h.b16 %v490
    %v514 = vunpack.c.l.b16 %v491
    %v515 = vunpack.c.h.b16 %v491
    %v516 = vpack.c.b16 %v500, %v500
    %v517 = vpack.c.b16 %v501, %v501
    %v518 = vpack.c.b16 %v502, %v502
    %v519 = vpack.c.b16 %v503, %v503
    %v520 = vpack.c.b16 %v504, %v504
    %v521 = vpack.c.b16 %v505, %v505
    %v522 = vpack.c.b16 %v506, %v506
    %v523 = vpack.c.b16 %v507, %v507
    %v524 = vpack.c.b16 %v508, %v508
    %v525 = vpack.c.b16 %v509, %v509
    %v526 = vpack.c.b16 %v510, %v510
    %v527 = vpack.c.b16 %v511, %v511
    %v528 = vpack.c.b16 %v512, %v512
    %v529 = vpack.c.b16 %v513, %v513
    %v530 = vpack.c.b16 %v514, %v514
    %v531 = vpack.c.b16 %v515, %v515
    %548 = vst [vmem:[#allocation7] sm:$0xf] %v516
    %549 = vst [vmem:[#allocation7 + $0x4] sm:$0xf] %v517
    %550 = vst [vmem:[#allocation7 + $0x8] sm:$0xf] %v518
    %551 = vst [vmem:[#allocation7 + $0xc] sm:$0xf] %v519
    %552 = vst [vmem:[#allocation7 + $0x10] sm:$0xf] %v520
    %553 = vst [vmem:[#allocation7 + $0x14] sm:$0xf] %v521
    %554 = vst [vmem:[#allocation7 + $0x18] sm:$0xf] %v522
    %555 = vst [vmem:[#allocation7 + $0x1c] sm:$0xf] %v523
    %556 = vst [vmem:[#allocation7 + $0x20] sm:$0xf] %v524
    %557 = vst [vmem:[#allocation7 + $0x24] sm:$0xf] %v525
    %558 = vst [vmem:[#allocation7 + $0x28] sm:$0xf] %v526
    %559 = vst [vmem:[#allocation7 + $0x2c] sm:$0xf] %v527
    %560 = vst [vmem:[#allocation7 + $0x30] sm:$0xf] %v528
    %561 = vst [vmem:[#allocation7 + $0x34] sm:$0xf] %v529
    %562 = vst [vmem:[#allocation7 + $0x38] sm:$0xf] %v530
    %563 = vst [vmem:[#allocation7 + $0x3c] sm:$0xf] %v531
    // Predicated region
    $region22: #{tpu_custom_call.1} parent=1 // pred_check
      _
    $region23: #{tpu_custom_call.1} parent=1 // pred_check_branch
      %565 = sbr.rel (0) target = $region25
    $region24: #{tpu_custom_call.1} parent=1 // pred_region
      %s567 = ssub.s32 1024, 1024
      %568 = vsyncadd [#allocation4], %s567
      %s569 = sshll.u32 [#allocation7], 4
      %s570 = int_to_ptr.vmem [resolvable:$true] %s569
      %575 = dma.vmem_to_hbm [thread:$0]  %s570, 1024, %s3, [#allocation4], 64, 64, 4
    $region25: #{tpu_custom_call.1} parent=1 // pred_fallthru
      _
    // Predicated region
    $region26: #{tpu_custom_call.1} parent=1 // pred_check
      _
    $region27: #{tpu_custom_call.1} parent=1 // pred_check_branch
      %577 = sbr.rel (0) target = $region29
    $region28: #{tpu_custom_call.1} parent=1 // pred_region
      %578 = dma.done [#allocation4], 1024
    $region29: #{tpu_custom_call.1} parent=1 // pred_fallthru
      _
    %579 = vsyncpa [#allocation3], 1
    %580 = vsyncpa [#allocation6], 1
    %581 = vsyncpa [#allocation4], 1

</llo_original>
